<compile_context>
chip_gen: v7x
topology: tpu7x:2x2x1
jax: 0.10.0
libtpu: 0.0.40
codegen_flags: <defaults>
</compile_context>

<pallas_src>
import functools

import jax
import jax.numpy as jnp
from jax.experimental import pallas as pl
from jax.experimental.pallas import tpu as pltpu


def _ffn_kernel(x_ref, w13_ref, w2t_ref, o_ref, acc_ref, *, th):
    # x_ref:   (TM, dim)      bf16 input row tile (resident across hidden tiles)
    # w13_ref: (dim, 2*TH)    fused [w1^T | w3^T] tile for hidden tile h (bf16)
    # w2t_ref: (TH, dim)      down-proj (w2^T) tile for hidden tile h (bf16)
    # o_ref:   (TM, dim)      output row tile (written on the last hidden step)
    # acc_ref: (TM, dim) f32  VMEM accumulator (resident across the reduction)
    h = pl.program_id(1)

    @pl.when(h == 0)
    def _():
        acc_ref[...] = jnp.zeros_like(acc_ref)

    x = x_ref[...]
    # Fused gate + up projection: single MXU pass over this x tile.
    h13 = jnp.dot(x, w13_ref[...], preferred_element_type=jnp.float32)  # (TM, 2*TH)
    h1 = h13[:, :th]
    h3 = h13[:, th:]
    gated = (h1 * jax.nn.sigmoid(h1)) * h3  # SiLU(h1) * h3, in f32

    # Partial down projection; accumulate the contraction over hidden tiles.
    acc_ref[...] += jnp.dot(gated.astype(w2t_ref.dtype), w2t_ref[...],
                            preferred_element_type=jnp.float32)

    @pl.when(h == pl.num_programs(1) - 1)
    def _():
        o_ref[...] = acc_ref[...].astype(o_ref.dtype)


def _round_up(x, n):
    return ((x + n - 1) // n) * n


def _default_vmem_limit():
    """~80% of physical VMEM (headroom for temps / compiler scratch), <=112MiB."""
    try:
        info = pltpu.get_tpu_info()
        cap = getattr(info, "vmem_capacity_bytes", None)
        if cap:
            return min(112 * 1024 * 1024, int(cap * 0.8))
    except Exception:
        pass
    return 48 * 1024 * 1024  # conservative fallback (fits v7x's 64 MiB)


def _vmem_estimate(tm, th, dim):
    """Rough per-step VMEM working set (double-buffered bf16 I/O, f32 acc+temps)."""
    x_b = 2 * tm * dim * 2
    w13_b = 2 * dim * (2 * th) * 2
    w2_b = 2 * th * dim * 2
    out_b = 2 * tm * dim * 2
    acc_b = tm * dim * 4
    temps = tm * (2 * th) * 4 + tm * th * 4  # h13 + gated (f32)
    return x_b + w13_b + w2_b + out_b + acc_b + temps


def prepare_ffn_weights(w1, w2, w3, *, th=512, dtype=jnp.bfloat16):
    """One-time weight prep: transpose + gate/up fusion + hidden padding + cast.

    w1, w3: (hidden, dim); w2: (dim, hidden)  [nn.Linear (out, in) layout]
    Returns:
      w13t: (n_h, dim, 2*th)  per-hidden-tile contiguous [w1_tile | w3_tile]
      w2t:  (hidden_pad, dim)
    Hidden is zero-padded to a multiple of `th`; the padding contributes 0.
    """
    hidden, dim = w1.shape
    hidden_pad = _round_up(hidden, th)
    pad = hidden_pad - hidden

    w1t = jnp.transpose(w1)   # (dim, hidden)
    w3t = jnp.transpose(w3)   # (dim, hidden)
    w2t = jnp.transpose(w2)   # (hidden, dim)
    if pad:
        w1t = jnp.pad(w1t, ((0, 0), (0, pad)))
        w3t = jnp.pad(w3t, ((0, 0), (0, pad)))
        w2t = jnp.pad(w2t, ((0, pad), (0, 0)))

    n_h = hidden_pad // th
    w13t = jnp.concatenate(
        [w1t.reshape(dim, n_h, th), w3t.reshape(dim, n_h, th)], axis=-1
    )                                   # (dim, n_h, 2*th)
    w13t = jnp.transpose(w13t, (1, 0, 2))  # (n_h, dim, 2*th) contiguous per tile
    return w13t.astype(dtype), w2t.astype(dtype)


def feed_forward(x, w13t, w2t, *, tm=512, compute_dtype=jnp.bfloat16,
                 out_dtype=None, vmem_limit_bytes=None, weight_buffer_count=None):
    """x: [..., dim]; w13t: [n_h, dim, 2*th]; w2t: [n_h*th, dim]."""
    dim = x.shape[-1]
    n_h, dim_w, two_th = w13t.shape
    assert two_th % 2 == 0
    th = two_th // 2                   # th is carried by the weight layout
    assert dim_w == dim, "weight dim mismatch"
    assert w2t.shape == (n_h * th, dim), "w2t / w13t tiling mismatch"
    out_dtype = compute_dtype if out_dtype is None else out_dtype

    lead = x.shape[:-1]
    m = 1
    for s in lead:
        m *= s

    if vmem_limit_bytes is None:
        vmem_limit_bytes = _default_vmem_limit()

    # Row tile: multiple of 16 (bf16 sublane packing); shrink if VMEM-tight.
    tm = max(16, min(tm, _round_up(m, 16)))
    while tm > 128 and _vmem_estimate(tm, th, dim) > 0.9 * vmem_limit_bytes:
        tm //= 2
    m_pad = _round_up(m, tm)

    x2d = x.reshape(m, dim)
    if x2d.dtype != compute_dtype:
        x2d = x2d.astype(compute_dtype)
    if m_pad != m:
        x2d = jnp.pad(x2d, ((0, m_pad - m), (0, 0)))

    w13_spec = pl.BlockSpec((None, dim, 2 * th), lambda i, h: (h, 0, 0))
    w2_spec = pl.BlockSpec((th, dim), lambda i, h: (h, 0))
    if weight_buffer_count is not None:
        # Optional deeper weight pipelining (enable only with VMEM headroom).
        w13_spec = pl.BlockSpec((None, dim, 2 * th), lambda i, h: (h, 0, 0),
                                pipeline_mode=pl.Buffered(weight_buffer_count))
        w2_spec = pl.BlockSpec((th, dim), lambda i, h: (h, 0),
                               pipeline_mode=pl.Buffered(weight_buffer_count))

    kernel = functools.partial(_ffn_kernel, th=th)

    out2d = pl.pallas_call(
        kernel,
        out_shape=jax.ShapeDtypeStruct((m_pad, dim), out_dtype),
        grid_spec=pltpu.PrefetchScalarGridSpec(
            num_scalar_prefetch=0,
            grid=(m_pad // tm, n_h),                            # rows, hidden (reduction last)
            in_specs=[
                pl.BlockSpec((tm, dim), lambda i, h: (i, 0)),   # x row tile
                w13_spec,                                       # fused [w1|w3] tile
                w2_spec,                                        # w2^T tile
            ],
            out_specs=pl.BlockSpec((tm, dim), lambda i, h: (i, 0)),
            scratch_shapes=[pltpu.VMEM((tm, dim), jnp.float32)],  # f32 accumulator
        ),
        compiler_params=pltpu.CompilerParams(
            dimension_semantics=("parallel", "arbitrary"),
            vmem_limit_bytes=vmem_limit_bytes,
        ),
    )(x2d, w13t, w2t)

    return out2d[:m].reshape(*lead, dim)


def _hidden_dim(dim, multiple_of=256, ffn_dim_multiplier=None):
    hidden_dim = 4 * dim
    hidden_dim = int(2 * hidden_dim / 3)
    if ffn_dim_multiplier is not None:
        hidden_dim = int(ffn_dim_multiplier * hidden_dim)
    return multiple_of * ((hidden_dim + multiple_of - 1) // multiple_of)


if __name__ == "__main__":
    # Small shapes consistent with the module: dim=128, multiple_of=128 -> hidden=384
    batch, seq, dim, multiple_of = 2, 8, 128, 128
    hidden = _hidden_dim(dim, multiple_of)  # 384

    key = jax.random.PRNGKey(0)
    kx, k1, k2, k3 = jax.random.split(key, 4)
    x = jax.random.normal(kx, (batch, seq, dim), dtype=jnp.float32)
    # nn.Linear weight layout: (out_features, in_features)
    w1 = jax.random.normal(k1, (hidden, dim), dtype=jnp.float32) * 0.02
    w2 = jax.random.normal(k2, (dim, hidden), dtype=jnp.float32) * 0.02
    w3 = jax.random.normal(k3, (hidden, dim), dtype=jnp.float32) * 0.02

    # One-time prep; th=256 here so the demo exercises the multi-step reduction
    # path and the hidden zero-padding (384 -> 512, n_h=2).
    w13t, w2t = prepare_ffn_weights(w1, w2, w3, th=256)

    # Keep activations bf16 upstream (avoids an extra cast pass in the wrapper).
    x_bf16 = x.astype(jnp.bfloat16)
    out = feed_forward(x_bf16, w13t, w2t)
    out = jax.block_until_ready(out)

    # Reference mirroring the kernel's bf16-operand / f32-accumulate numerics.
    xb = x_bf16.astype(jnp.float32)
    w1b = w1.astype(jnp.bfloat16).astype(jnp.float32)
    w3b = w3.astype(jnp.bfloat16).astype(jnp.float32)
    w2b = w2.astype(jnp.bfloat16).astype(jnp.float32)
    h1 = jnp.einsum("bsd,hd->bsh", xb, w1b)
    h3 = jnp.einsum("bsd,hd->bsh", xb, w3b)
    gated = (h1 * jax.nn.sigmoid(h1) * h3).astype(jnp.bfloat16).astype(jnp.float32)
    ref = jnp.einsum("bsh,dh->bsd", gated, w2b).astype(jnp.bfloat16).astype(jnp.float32)

    assert out.shape == (batch, seq, dim)
    assert out.dtype == jnp.bfloat16  # compute/output dtype (halves HBM writeback)
    out_f32 = out.astype(jnp.float32)
    max_err = float(jnp.max(jnp.abs(out_f32 - ref)))
    assert jnp.allclose(out_f32, ref, atol=5e-3, rtol=5e-2), \
        f"mismatch vs reference (max abs err={max_err})"

    print("KERNEL_OK")
</pallas_src>

<mosaic_0001>
module attributes {stable_mosaic.version = 11 : i64} {
  func.func @_ffn_kernel(%arg0: i32, %arg1: i32, %arg2: memref<16x128xbf16, #tpu.memory_space<vmem>>, %arg3: memref<1x128x512xbf16, #tpu.memory_space<vmem>>, %arg4: memref<256x128xbf16, #tpu.memory_space<vmem>>, %arg5: memref<16x128xbf16, #tpu.memory_space<vmem>>, %arg6: memref<16x128xf32, #tpu.memory_space<vmem>>) attributes {dimension_semantics = [#tpu.dimension_semantics<parallel>, #tpu.dimension_semantics<arbitrary>], iteration_bounds = array<i64: 1, 2>, scalar_prefetch = 0 : i64, scratch_operands = 1 : i64, tpu.core_type = #tpu.core_type<tc>, window_params = [{transform_indices = @transform_0, window_bounds = array<i64: 16, 128>}, {transform_indices = @transform_1, window_bounds = array<i64: 1, 128, 512>}, {transform_indices = @transform_2, window_bounds = array<i64: 256, 128>}, {transform_indices = @transform_3, window_bounds = array<i64: 16, 128>}]} {
    %c0_i32 = arith.constant 0 : i32
    %0 = arith.cmpi eq, %arg1, %c0_i32 : i32
    %1 = arith.extui %0 : i1 to i32
    %c0_i32_0 = arith.constant 0 : i32
    %2 = arith.cmpi ne, %1, %c0_i32_0 : i32
    scf.if %2 {
      %cst_14 = arith.constant 0.000000e+00 : f32
      %25 = vector.broadcast %cst_14 : f32 to vector<16x128xf32>
      %c0_15 = arith.constant 0 : index
      %c0_16 = arith.constant 0 : index
      %26 = vector.load %arg6[%c0_15, %c0_16] : memref<16x128xf32, #tpu.memory_space<vmem>>, vector<16x128xf32>
      tpu.vector_store %arg6[%c0_15, %c0_16], %25 {strides = array<i32>} : memref<16x128xf32, #tpu.memory_space<vmem>>, vector<16x128xf32>,
    } else {
    }
    %c0 = arith.constant 0 : index
    %c0_1 = arith.constant 0 : index
    %3 = vector.load %arg2[%c0, %c0_1] : memref<16x128xbf16, #tpu.memory_space<vmem>>, vector<16x128xbf16>
    %c0_2 = arith.constant 0 : index
    %c0_3 = arith.constant 0 : index
    %c0_4 = arith.constant 0 : index
    %4 = vector.load %arg3[%c0_2, %c0_3, %c0_4] : memref<1x128x512xbf16, #tpu.memory_space<vmem>>, vector<1x128x512xbf16>
    %5 = vector.shape_cast %4 : vector<1x128x512xbf16> to vector<128x512xbf16>
    %cst = arith.constant dense<0.000000e+00> : vector<16x512xf32>
    %6 = tpu.matmul %3, %5, %cst {dimension_numbers = #tpu.dot_dimension_numbers<[1], [0], [0], [1], [0, 0, 1, 1], [], []>} : vector<16x128xbf16>, vector<128x512xbf16>, vector<16x512xf32> -> vector<16x512xf32>
    %7 = vector.extract_strided_slice %6 {offsets = [0, 0], sizes = [16, 256], strides = [1, 1]} : vector<16x512xf32> to vector<16x256xf32>
    %8 = vector.extract_strided_slice %6 {offsets = [0, 256], sizes = [16, 256], strides = [1, 1]} : vector<16x512xf32> to vector<16x256xf32>
    %9 = arith.negf %7 : vector<16x256xf32>
    %10 = math.exp %9 : vector<16x256xf32>
    %cst_5 = arith.constant 1.000000e+00 : f32
    %11 = vector.broadcast %cst_5 : f32 to vector<16x256xf32>
    %12 = arith.addf %11, %10 : vector<16x256xf32>
    %13 = arith.divf %11, %12 : vector<16x256xf32>
    %14 = arith.mulf %7, %13 : vector<16x256xf32>
    %15 = arith.mulf %14, %8 : vector<16x256xf32>
    %c0_6 = arith.constant 0 : index
    %c0_7 = arith.constant 0 : index
    %16 = vector.load %arg6[%c0_6, %c0_7] : memref<16x128xf32, #tpu.memory_space<vmem>>, vector<16x128xf32>
    %17 = arith.truncf %15 : vector<16x256xf32> to vector<16x256xbf16>
    %c0_8 = arith.constant 0 : index
    %c0_9 = arith.constant 0 : index
    %18 = vector.load %arg4[%c0_8, %c0_9] : memref<256x128xbf16, #tpu.memory_space<vmem>>, vector<256x128xbf16>
    %cst_10 = arith.constant dense<0.000000e+00> : vector<16x128xf32>
    %19 = tpu.matmul %17, %18, %cst_10 {dimension_numbers = #tpu.dot_dimension_numbers<[1], [0], [0], [1], [0, 0, 1, 1], [], []>} : vector<16x256xbf16>, vector<256x128xbf16>, vector<16x128xf32> -> vector<16x128xf32>
    %20 = arith.addf %16, %19 : vector<16x128xf32>
    %c0_11 = arith.constant 0 : index
    %c0_12 = arith.constant 0 : index
    %21 = vector.load %arg6[%c0_11, %c0_12] : memref<16x128xf32, #tpu.memory_space<vmem>>, vector<16x128xf32>
    tpu.vector_store %arg6[%c0_11, %c0_12], %20 {strides = array<i32>} : memref<16x128xf32, #tpu.memory_space<vmem>>, vector<16x128xf32>,
    %c1_i32 = arith.constant 1 : i32
    %22 = arith.cmpi eq, %arg1, %c1_i32 : i32
    %23 = arith.extui %22 : i1 to i32
    %c0_i32_13 = arith.constant 0 : i32
    %24 = arith.cmpi ne, %23, %c0_i32_13 : i32
    scf.if %24 {
      %c0_14 = arith.constant 0 : index
      %c0_15 = arith.constant 0 : index
      %25 = vector.load %arg6[%c0_14, %c0_15] : memref<16x128xf32, #tpu.memory_space<vmem>>, vector<16x128xf32>
      %26 = arith.truncf %25 : vector<16x128xf32> to vector<16x128xbf16>
      %c0_16 = arith.constant 0 : index
      %c0_17 = arith.constant 0 : index
      %27 = vector.load %arg5[%c0_16, %c0_17] : memref<16x128xbf16, #tpu.memory_space<vmem>>, vector<16x128xbf16>
      tpu.vector_store %arg5[%c0_16, %c0_17], %26 {strides = array<i32>} : memref<16x128xbf16, #tpu.memory_space<vmem>>, vector<16x128xbf16>,
    } else {
    }
    return
  }
  func.func @transform_0(%arg0: i32, %arg1: i32) -> (i32, i32) {
    %c0_i32 = arith.constant 0 : i32
    %c0_i32_0 = arith.constant 0 : i32
    return %arg0, %c0_i32 : i32, i32
  }
  func.func @transform_1(%arg0: i32, %arg1: i32) -> (i32, i32, i32) {
    %c0_i32 = arith.constant 0 : i32
    %c0_i32_0 = arith.constant 0 : i32
    %c0_i32_1 = arith.constant 0 : i32
    return %arg1, %c0_i32, %c0_i32_0 : i32, i32, i32
  }
  func.func @transform_2(%arg0: i32, %arg1: i32) -> (i32, i32) {
    %c0_i32 = arith.constant 0 : i32
    %c0_i32_0 = arith.constant 0 : i32
    return %arg1, %c0_i32 : i32, i32
  }
  func.func @transform_3(%arg0: i32, %arg1: i32) -> (i32, i32) {
    %c0_i32 = arith.constant 0 : i32
    %c0_i32_0 = arith.constant 0 : i32
    return %arg0, %c0_i32 : i32, i32
  }
}

</mosaic_0001>

<llo_original>
// kernel: tpu_custom_call.1
$region0: #{tpu_custom_call.1}
  #allocation0 [shape = 'u32[]', space=smem, size = 0x4, offset = 0x4, fixed_abs, tag = 'smem constant byte address 0x4 - core index']
  #allocation1 [shape = 'u32[144,128]{1,0:T(1,128)}', space=vmem, size = 0x12000, scoped, tag = 'internal scratch']
  #allocation2 [shape = 'f32[16,128]{1,0:T(8,128)}', space=vmem, size = 0x2000, scoped, tag = 'scratch operand']
  %s0 = inlined_call_operand.hbm [shape: bf16[16,128], index: 0, kind: input, shape index: {}]
  %s1 = inlined_call_operand.hbm [shape: bf16[2,128,512], index: 1, kind: input, shape index: {}]
  %s2 = inlined_call_operand.hbm [shape: bf16[512,128], index: 2, kind: input, shape index: {}]
  %s3 = inlined_call_operand.hbm [shape: bf16[16,128], index: 3, kind: output, shape index: {}]
  %s4 = sld [smem:[#allocation0]]
  $region65: #{tpu_custom_call.1} parent=0
    _
  %s6 = ssub.s32 1, %s4
  %s7 = scalar_select 0, %s6, %s4
  $region1: #{tpu_custom_call.1} parent=0
    #allocation3 [shape = 'u8[4096]{0}', space=vmem, size = 0x1000, scoped, tag = 'input window, operand 0, single buffered']
    #allocation4 [shape = 's32[2]{0}', space=sflag, size = 0x8, scoped, tag = 'scoped memory for tpu_custom_call.1']
    #allocation5 [shape = 's32[2]{0}', space=sflag, size = 0x8, scoped, tag = 'scoped memory for tpu_custom_call.1']
    #allocation6 [shape = 'u8[262144]{0}', space=vmem, size = 0x40000, scoped, tag = 'input window, operand 1']
    #allocation7 [shape = 's32[2]{0}', space=sflag, size = 0x8, scoped, tag = 'scoped memory for tpu_custom_call.1']
    #allocation8 [shape = 'u8[131072]{0}', space=vmem, size = 0x20000, scoped, tag = 'input window, operand 2']
    #allocation9 [shape = 'u8[4096]{0}', space=vmem, size = 0x1000, scoped, tag = 'output window, operand 0, single buffered']
    %8 = vsyncpa [#allocation4], 0
    %9 = vsyncpa [#allocation7], 0
    %s10 = scalar_lea.sflag [#allocation7], 1
    %11 = vsyncpa %s10, 0
    %12 = vsyncpa [#allocation5], 0
    loop: start=0, step=1, limit=4
    $region2: #{tpu_custom_call.1} parent=1 // loop_pre_header
      _
    $region3: #{tpu_custom_call.1} parent=1 // loop_header
      %s14 = sphi 0, %s18
      %p15 = scmp.ge.s32.totalorder %s14, 4
      %s21 = sphi 0, %s33
      %s22 = sphi 0, %s29
      %s23 = sphi 0, %s21
      %s24 = sphi 0, %s22
      %s25 = sphi 0, %s23
      %s26 = sphi 0, %s24
      %s36 = sphi 0, %s38
      %s39 = sphi 0, %s36
      %s40 = sphi 0, %s39
      %s56 = sphi 0, %s40
      %s62 = sphi 0, %s64
      %s65 = sphi 0, %s62
      %s66 = sphi 0, %s65
      %s82 = sphi 0, %s66
      %s88 = sphi 0, %s90
      %s91 = sphi 0, %s88
      %s92 = sphi 0, %s91
      %s108 = sphi 0, %s92
      %s114 = sphi 0, %s116
      %s117 = sphi 0, %s114
      %s118 = sphi 0, %s117
      %s134 = sphi 0, %s118
    $region4: #{tpu_custom_call.1} parent=1 // loop_header_branch
      %17 = sbr.rel (%p15) target = $region8
    $region5: #{tpu_custom_call.1} parent=1 // loop_body
      %s19 = ssub.s32 %s14, 1
      %s20 = ssub.s32 %s14, 2
      %s27 = sadd.s32 1, %s22
      %p28 = scmp.ge.s32.totalorder %s27, 2
      %s29 = scalar_select %p28, 0, %s27
      %s30 = sadd.s32 1, %s21
      %s31 = scalar_select %p28, %s30, %s21
      %p32 = scmp.ge.s32.totalorder %s31, 1
      %s33 = scalar_select %p32, 0, %s31
      %s34 = ssub.s32 %s21, %s33
      %p35 = scmp.eq.s32.totalorder %s34, 0
      %s37 = sadd.s32 %s36, 1
      %s38 = scalar_select %p35, %s36, %s37
      %p41 = pneg %p35
      %p42 = scmp.eq.s32.totalorder %s14, 1
      %p43 = por %p41, %p42
      %p44 = scmp.ne.s32.totalorder %s36, %s39
      %p45 = scmp.eq.s32.totalorder %s14, 0
      %p46 = por %p44, %p45
      %p47 = scmp.ne.s32.totalorder %s36, %s39
      %p48 = scmp.eq.s32.totalorder %s19, 1
      %p49 = por %p47, %p48
      %p50 = scmp.ne.s32.totalorder %s39, %s40
      %p51 = scmp.eq.s32.totalorder %s19, 0
      %p52 = por %p50, %p51
      %p53 = scmp.ne.s32.totalorder %s39, %s40
      %p54 = scmp.eq.s32.totalorder %s20, 1
      %p55 = por %p53, %p54
      %p57 = scmp.ne.s32.totalorder %s40, %s56
      %p58 = scmp.eq.s32.totalorder %s20, 0
      %p59 = por %p57, %p58
      %s60 = ssub.s32 %s22, %s29
      %p61 = scmp.eq.s32.totalorder %s60, 0
      %s63 = sadd.s32 %s62, 1
      %s64 = scalar_select %p61, %s62, %s63
      %p67 = pneg %p61
      %p68 = scmp.eq.s32.totalorder %s14, 1
      %p69 = por %p67, %p68
      %p70 = scmp.ne.s32.totalorder %s62, %s65
      %p71 = scmp.eq.s32.totalorder %s14, 0
      %p72 = por %p70, %p71
      %p73 = scmp.ne.s32.totalorder %s62, %s65
      %p74 = scmp.eq.s32.totalorder %s19, 1
      %p75 = por %p73, %p74
      %p76 = scmp.ne.s32.totalorder %s65, %s66
      %p77 = scmp.eq.s32.totalorder %s19, 0
      %p78 = por %p76, %p77
      %p79 = scmp.ne.s32.totalorder %s65, %s66
      %p80 = scmp.eq.s32.totalorder %s20, 1
      %p81 = por %p79, %p80
      %p83 = scmp.ne.s32.totalorder %s66, %s82
      %p84 = scmp.eq.s32.totalorder %s20, 0
      %p85 = por %p83, %p84
      %s86 = ssub.s32 %s22, %s29
      %p87 = scmp.eq.s32.totalorder %s86, 0
      %s89 = sadd.s32 %s88, 1
      %s90 = scalar_select %p87, %s88, %s89
      %p93 = pneg %p87
      %p94 = scmp.eq.s32.totalorder %s14, 1
      %p95 = por %p93, %p94
      %p96 = scmp.ne.s32.totalorder %s88, %s91
      %p97 = scmp.eq.s32.totalorder %s14, 0
      %p98 = por %p96, %p97
      %p99 = scmp.ne.s32.totalorder %s88, %s91
      %p100 = scmp.eq.s32.totalorder %s19, 1
      %p101 = por %p99, %p100
      %p102 = scmp.ne.s32.totalorder %s91, %s92
      %p103 = scmp.eq.s32.totalorder %s19, 0
      %p104 = por %p102, %p103
      %p105 = scmp.ne.s32.totalorder %s91, %s92
      %p106 = scmp.eq.s32.totalorder %s20, 1
      %p107 = por %p105, %p106
      %p109 = scmp.ne.s32.totalorder %s92, %s108
      %p110 = scmp.eq.s32.totalorder %s20, 0
      %p111 = por %p109, %p110
      %s112 = ssub.s32 %s21, %s33
      %p113 = scmp.eq.s32.totalorder %s112, 0
      %s115 = sadd.s32 %s114, 1
      %s116 = scalar_select %p113, %s114, %s115
      %p119 = pneg %p113
      %p120 = scmp.eq.s32.totalorder %s14, 1
      %p121 = por %p119, %p120
      %p122 = scmp.ne.s32.totalorder %s114, %s117
      %p123 = scmp.eq.s32.totalorder %s14, 0
      %p124 = por %p122, %p123
      %p125 = scmp.ne.s32.totalorder %s114, %s117
      %p126 = scmp.eq.s32.totalorder %s19, 1
      %p127 = por %p125, %p126
      %p128 = scmp.ne.s32.totalorder %s117, %s118
      %p129 = scmp.eq.s32.totalorder %s19, 0
      %p130 = por %p128, %p129
      %p131 = scmp.ne.s32.totalorder %s117, %s118
      %p132 = scmp.eq.s32.totalorder %s20, 1
      %p133 = por %p131, %p132
      %p135 = scmp.ne.s32.totalorder %s118, %s134
      %p136 = scmp.eq.s32.totalorder %s20, 0
      %p137 = por %p135, %p136
      %p138 = scmp.le.s32.totalorder 1, %s14
      %p139 = scmp.lt.s32.totalorder %s14, 3
      %p140 = pnand %p138, %p139
      %p141 = pneg %p140
      // Predicated region
      $region9: #{tpu_custom_call.1} parent=5 // pred_check
        _
      $region10: #{tpu_custom_call.1} parent=5 // pred_check_branch
        %143 = sbr.rel (%p140) target = $region12
      $region11: #{tpu_custom_call.1} parent=5 // pred_region
        %s144 = ssub.s32 %s14, 1
        // Predicated region
        $region13: #{tpu_custom_call.1} parent=11 // pred_check
          %p145 = pneg %p52
        $region14: #{tpu_custom_call.1} parent=11 // pred_check_branch
          %147 = sbr.rel (%p145) target = $region16
        $region15: #{tpu_custom_call.1} parent=11 // pred_region
          %s148 = smul.u32 2, %s23
          %s150 = ssub.s32 128, 128
          %151 = vsyncadd [#allocation4], %s150
          %s152 = smul.addr %s148, 64
          %s153 = scalar_lea.hbm %s0, %s152
          %s154 = sshll.u32 [#allocation3], 4
          %s155 = int_to_ptr.vmem [resolvable:$true] %s154
          %160 = dma.hbm_to_vmem [thread:$0]  %s153, 128, %s155, [#allocation4], 64, 64, 4
        $region16: #{tpu_custom_call.1} parent=11 // pred_fallthru
          _
      $region12: #{tpu_custom_call.1} parent=5 // pred_fallthru
        _
      %p161 = scmp.lt.s32.totalorder %s14, 2
      // Predicated region
      $region17: #{tpu_custom_call.1} parent=5 // pred_check
        %p162 = pneg %p161
      $region18: #{tpu_custom_call.1} parent=5 // pred_check_branch
        %164 = sbr.rel (%p162) target = $region20
      $region19: #{tpu_custom_call.1} parent=5 // pred_region
        // Predicated region
        $region21: #{tpu_custom_call.1} parent=19 // pred_check
          %p165 = pneg %p72
        $region22: #{tpu_custom_call.1} parent=19 // pred_check_branch
          %167 = sbr.rel (%p165) target = $region24
        $region23: #{tpu_custom_call.1} parent=19 // pred_region
          %s168 = sand.u32 %s14, 1
          %s169 = scalar_lea.sflag [#allocation7], %s168
          %s170 = sand.u32 %s62, 1
          %s171 = smul.addr %s170, 256
          %s172 = scalar_lea.vmem [#allocation6], %s171
          %s174 = ssub.s32 4096, 4096
          %175 = vsyncadd %s169, %s174
          %s176 = smul.addr %s22, 64
          %s177 = smul.addr %s176, 64
          %s178 = scalar_lea.hbm %s1, %s177
          %s179 = sshll.u32 %s172, 4
          %s180 = int_to_ptr.vmem [resolvable:$true] %s179
          %185 = dma.hbm_to_vmem [thread:$0]  %s178, 4096, %s180, %s169, 256, 256, 16
        $region24: #{tpu_custom_call.1} parent=19 // pred_fallthru
          _
        // Predicated region
        $region25: #{tpu_custom_call.1} parent=19 // pred_check
          %p186 = pneg %p98
        $region26: #{tpu_custom_call.1} parent=19 // pred_check_branch
          %188 = sbr.rel (%p186) target = $region28
        $region27: #{tpu_custom_call.1} parent=19 // pred_region
          %s189 = sand.u32 %s14, 1
          %s190 = scalar_lea.sflag [#allocation7], %s189
          %s191 = sand.u32 %s88, 1
          %s192 = smul.addr %s191, 128
          %s193 = scalar_lea.vmem [#allocation8], %s192
          %s194 = smul.u32 32, %s22
          %s196 = ssub.s32 2048, 2048
          %197 = vsyncadd %s190, %s196
          %s198 = smul.addr %s194, 64
          %s199 = scalar_lea.hbm %s2, %s198
          %s200 = sshll.u32 %s193, 4
          %s201 = int_to_ptr.vmem [resolvable:$true] %s200
          %206 = dma.hbm_to_vmem [thread:$0]  %s199, 2048, %s201, %s190, 64, 64, 4
        $region28: #{tpu_custom_call.1} parent=19 // pred_fallthru
          _
      $region20: #{tpu_custom_call.1} parent=5 // pred_fallthru
        _
      %p207 = scmp.le.s32.totalorder 1, %s14
      %p208 = scmp.lt.s32.totalorder %s14, 3
      %p209 = pnand %p207, %p208
      %p210 = pneg %p209
      // Predicated region
      $region29: #{tpu_custom_call.1} parent=5 // pred_check
        _
      $region30: #{tpu_custom_call.1} parent=5 // pred_check_branch
        %212 = sbr.rel (%p209) target = $region32
      $region31: #{tpu_custom_call.1} parent=5 // pred_region
        %s213 = ssub.s32 %s14, 1
        // Predicated region
        $region33: #{tpu_custom_call.1} parent=31 // pred_check
          %p214 = pneg %p52
        $region34: #{tpu_custom_call.1} parent=31 // pred_check_branch
          %216 = sbr.rel (%p214) target = $region36
        $region35: #{tpu_custom_call.1} parent=31 // pred_region
          %217 = dma.done [#allocation4], 128
        $region36: #{tpu_custom_call.1} parent=31 // pred_fallthru
          _
        %s218 = sand.u32 %s19, 1
        %s219 = scalar_lea.sflag [#allocation7], %s218
        %s220 = sand.u32 %s65, 1
        %s221 = smul.addr %s220, 256
        %s222 = scalar_lea.vmem [#allocation6], %s221
        // Predicated region
        $region37: #{tpu_custom_call.1} parent=31 // pred_check
          %p223 = pneg %p78
        $region38: #{tpu_custom_call.1} parent=31 // pred_check_branch
          %225 = sbr.rel (%p223) target = $region40
        $region39: #{tpu_custom_call.1} parent=31 // pred_region
          %226 = dma.done %s219, 4096
        $region40: #{tpu_custom_call.1} parent=31 // pred_fallthru
          _
        %s227 = sand.u32 %s19, 1
        %s228 = scalar_lea.sflag [#allocation7], %s227
        %s229 = sand.u32 %s91, 1
        %s230 = smul.addr %s229, 128
        %s231 = scalar_lea.vmem [#allocation8], %s230
        // Predicated region
        $region41: #{tpu_custom_call.1} parent=31 // pred_check
          %p232 = pneg %p104
        $region42: #{tpu_custom_call.1} parent=31 // pred_check_branch
          %234 = sbr.rel (%p232) target = $region44
        $region43: #{tpu_custom_call.1} parent=31 // pred_region
          %235 = dma.done %s228, 2048
        $region44: #{tpu_custom_call.1} parent=31 // pred_fallthru
          _
        %p236 = pneg %p52
        %p237 = pneg %p49
        %s238 = sand.u32 %s19, 1
        %s239 = scalar_lea.sflag [#allocation7], %s238
        %s240 = sand.u32 %s65, 1
        %s241 = smul.addr %s240, 256
        %s242 = scalar_lea.vmem [#allocation6], %s241
        %p243 = pneg %p78
        %p244 = pneg %p75
        %s245 = sand.u32 %s19, 1
        %s246 = scalar_lea.sflag [#allocation7], %s245
        %s247 = sand.u32 %s91, 1
        %s248 = smul.addr %s247, 128
        %s249 = scalar_lea.vmem [#allocation8], %s248
        %p250 = pneg %p104
        %p251 = pneg %p101
        %p252 = pneg %p130
        %p253 = pneg %p127
        %s254 = smul.u32 2, %s23
        %s255 = smul.u32 32, %s24
        %s256 = smul.u32 2, %s23
        %p258 = scmp.eq.s32.totalorder %s24, 0
        // Predicated region
        $region45: #{tpu_custom_call.1} parent=31 // pred_check
          %p259 = pneg %p258
        $region46: #{tpu_custom_call.1} parent=31 // pred_check_branch
          %261 = sbr.rel (%p259) target = $region48
        $region47: #{tpu_custom_call.1} parent=31 // pred_region
          %262 = vst [vmem:[#allocation2] sm:$0xff] 0.0
          %263 = vst [vmem:[#allocation2 + $0x8] sm:$0xff] 0.0
        $region48: #{tpu_custom_call.1} parent=31 // pred_fallthru
          _
        %v264 = vld [vmem:[#allocation3] sm:$0xf]
        %v265 = vld [vmem:[#allocation3 + $0x4] sm:$0xf]
        %v266 = vld [vmem:[%s222] sm:$0xff]
        %v267 = vld [vmem:[%s222 + $0x8] sm:$0xff]
        %v268 = vld [vmem:[%s222 + $0x10] sm:$0xff]
        %v269 = vld [vmem:[%s222 + $0x18] sm:$0xff]
        %v270 = vld [vmem:[%s222 + $0x20] sm:$0xff]
        %v271 = vld [vmem:[%s222 + $0x28] sm:$0xff]
        %v272 = vld [vmem:[%s222 + $0x30] sm:$0xff]
        %v273 = vld [vmem:[%s222 + $0x38] sm:$0xff]
        %v274 = vld [vmem:[%s222 + $0x40] sm:$0xff]
        %v275 = vld [vmem:[%s222 + $0x48] sm:$0xff]
        %v276 = vld [vmem:[%s222 + $0x50] sm:$0xff]
        %v277 = vld [vmem:[%s222 + $0x58] sm:$0xff]
        %v278 = vld [vmem:[%s222 + $0x60] sm:$0xff]
        %v279 = vld [vmem:[%s222 + $0x68] sm:$0xff]
        %v280 = vld [vmem:[%s222 + $0x70] sm:$0xff]
        %v281 = vld [vmem:[%s222 + $0x78] sm:$0xff]
        %v282 = vld [vmem:[%s222 + $0x80] sm:$0xff]
        %v283 = vld [vmem:[%s222 + $0x88] sm:$0xff]
        %v284 = vld [vmem:[%s222 + $0x90] sm:$0xff]
        %v285 = vld [vmem:[%s222 + $0x98] sm:$0xff]
        %v286 = vld [vmem:[%s222 + $0xa0] sm:$0xff]
        %v287 = vld [vmem:[%s222 + $0xa8] sm:$0xff]
        %v288 = vld [vmem:[%s222 + $0xb0] sm:$0xff]
        %v289 = vld [vmem:[%s222 + $0xb8] sm:$0xff]
        %v290 = vld [vmem:[%s222 + $0xc0] sm:$0xff]
        %v291 = vld [vmem:[%s222 + $0xc8] sm:$0xff]
        %v292 = vld [vmem:[%s222 + $0xd0] sm:$0xff]
        %v293 = vld [vmem:[%s222 + $0xd8] sm:$0xff]
        %v294 = vld [vmem:[%s222 + $0xe0] sm:$0xff]
        %v295 = vld [vmem:[%s222 + $0xe8] sm:$0xff]
        %v296 = vld [vmem:[%s222 + $0xf0] sm:$0xff]
        %v297 = vld [vmem:[%s222 + $0xf8] sm:$0xff]
        %v300 = vunpack.c.l.b16 %v264
        %v301 = vunpack.c.l.b16 %v265
        %v302 = vpack.c.b16 %v301, %v300
        %v336 = vunpack.c.l.b16 %v266
        %v337 = vunpack.c.h.b16 %v266
        %v338 = vunpack.c.l.b16 %v267
        %v339 = vunpack.c.h.b16 %v267
        %v340 = vunpack.c.l.b16 %v268
        %v341 = vunpack.c.h.b16 %v268
        %v342 = vunpack.c.l.b16 %v269
        %v343 = vunpack.c.h.b16 %v269
        %v344 = vunpack.c.l.b16 %v270
        %v345 = vunpack.c.h.b16 %v270
        %v346 = vunpack.c.l.b16 %v271
        %v347 = vunpack.c.h.b16 %v271
        %v348 = vunpack.c.l.b16 %v272
        %v349 = vunpack.c.h.b16 %v272
        %v350 = vunpack.c.l.b16 %v273
        %v351 = vunpack.c.h.b16 %v273
        %v352 = vunpack.c.l.b16 %v274
        %v353 = vunpack.c.h.b16 %v274
        %v354 = vunpack.c.l.b16 %v275
        %v355 = vunpack.c.h.b16 %v275
        %v356 = vunpack.c.l.b16 %v276
        %v357 = vunpack.c.h.b16 %v276
        %v358 = vunpack.c.l.b16 %v277
        %v359 = vunpack.c.h.b16 %v277
        %v360 = vunpack.c.l.b16 %v278
        %v361 = vunpack.c.h.b16 %v278
        %v362 = vunpack.c.l.b16 %v279
        %v363 = vunpack.c.h.b16 %v279
        %v364 = vunpack.c.l.b16 %v280
        %v365 = vunpack.c.h.b16 %v280
        %v366 = vunpack.c.l.b16 %v281
        %v367 = vunpack.c.h.b16 %v281
        %v368 = vunpack.c.l.b16 %v282
        %v369 = vunpack.c.h.b16 %v282
        %v370 = vunpack.c.l.b16 %v283
        %v371 = vunpack.c.h.b16 %v283
        %v372 = vunpack.c.l.b16 %v284
        %v373 = vunpack.c.h.b16 %v284
        %v374 = vunpack.c.l.b16 %v285
        %v375 = vunpack.c.h.b16 %v285
        %v376 = vunpack.c.l.b16 %v286
        %v377 = vunpack.c.h.b16 %v286
        %v378 = vunpack.c.l.b16 %v287
        %v379 = vunpack.c.h.b16 %v287
        %v380 = vunpack.c.l.b16 %v288
        %v381 = vunpack.c.h.b16 %v288
        %v382 = vunpack.c.l.b16 %v289
        %v383 = vunpack.c.h.b16 %v289
        %v384 = vunpack.c.l.b16 %v290
        %v385 = vunpack.c.h.b16 %v290
        %v386 = vunpack.c.l.b16 %v291
        %v387 = vunpack.c.h.b16 %v291
        %v388 = vunpack.c.l.b16 %v292
        %v389 = vunpack.c.h.b16 %v292
        %v390 = vunpack.c.l.b16 %v293
        %v391 = vunpack.c.h.b16 %v293
        %v392 = vunpack.c.l.b16 %v294
        %v393 = vunpack.c.h.b16 %v294
        %v394 = vunpack.c.l.b16 %v295
        %v395 = vunpack.c.h.b16 %v295
        %v396 = vunpack.c.l.b16 %v296
        %v397 = vunpack.c.h.b16 %v296
        %v398 = vunpack.c.l.b16 %v297
        %v399 = vunpack.c.h.b16 %v297
        %v400 = vpack.c.b16 %v340, %v336
        %v401 = vpack.c.b16 %v341, %v337
        %v402 = vpack.c.b16 %v342, %v338
        %v403 = vpack.c.b16 %v343, %v339
        %v404 = vpack.c.b16 %v348, %v344
        %v405 = vpack.c.b16 %v349, %v345
        %v406 = vpack.c.b16 %v350, %v346
        %v407 = vpack.c.b16 %v351, %v347
        %v408 = vpack.c.b16 %v356, %v352
        %v409 = vpack.c.b16 %v357, %v353
        %v410 = vpack.c.b16 %v358, %v354
        %v411 = vpack.c.b16 %v359, %v355
        %v412 = vpack.c.b16 %v364, %v360
        %v413 = vpack.c.b16 %v365, %v361
        %v414 = vpack.c.b16 %v366, %v362
        %v415 = vpack.c.b16 %v367, %v363
        %v416 = vpack.c.b16 %v372, %v368
        %v417 = vpack.c.b16 %v373, %v369
        %v418 = vpack.c.b16 %v374, %v370
        %v419 = vpack.c.b16 %v375, %v371
        %v420 = vpack.c.b16 %v380, %v376
        %v421 = vpack.c.b16 %v381, %v377
        %v422 = vpack.c.b16 %v382, %v378
        %v423 = vpack.c.b16 %v383, %v379
        %v424 = vpack.c.b16 %v388, %v384
        %v425 = vpack.c.b16 %v389, %v385
        %v426 = vpack.c.b16 %v390, %v386
        %v427 = vpack.c.b16 %v391, %v387
        %v428 = vpack.c.b16 %v396, %v392
        %v429 = vpack.c.b16 %v397, %v393
        %v430 = vpack.c.b16 %v398, %v394
        %v431 = vpack.c.b16 %v399, %v395
        %464 = vmatprep.subr.bf16.mxu0 %v401
        %465 = vmatpush1.bf16.msra.mxu0 %v400
        %466 = vmatprep.subr.bf16.mxu0 %v405
        %467 = vmatpush1.bf16.msra.mxu0 %v404
        %468 = vmatprep.subr.bf16.mxu0 %v409
        %469 = vmatpush1.bf16.msra.mxu0 %v408
        %470 = vmatprep.subr.bf16.mxu0 %v413
        %471 = vmatpush1.bf16.msra.mxu0 %v412
        %472 = vmatprep.subr.bf16.mxu0 %v417
        %473 = vmatpush1.bf16.msra.mxu0 %v416
        %474 = vmatprep.subr.bf16.mxu0 %v421
        %475 = vmatpush1.bf16.msra.mxu0 %v420
        %476 = vmatprep.subr.bf16.mxu0 %v425
        %477 = vmatpush1.bf16.msra.mxu0 %v424
        %478 = vmatprep.subr.bf16.mxu0 %v429
        %479 = vmatpush1.bf16.msra.mxu0 %v428
        %480 = vmatprep.subr.bf16.mxu0 0
        %481 = vmatpush1.bf16.msra.mxu0 0
        %482 = vmatprep.subr.bf16.mxu0 0
        %483 = vmatpush1.bf16.msra.mxu0 0
        %484 = vmatprep.subr.bf16.mxu0 0
        %485 = vmatpush1.bf16.msra.mxu0 0
        %486 = vmatprep.subr.bf16.mxu0 0
        %487 = vmatpush1.bf16.msra.mxu0 0
        %488 = vmatprep.subr.bf16.mxu0 0
        %489 = vmatpush1.bf16.msra.mxu0 0
        %490 = vmatprep.subr.bf16.mxu0 0
        %491 = vmatpush1.bf16.msra.mxu0 0
        %492 = vmatprep.subr.bf16.mxu0 0
        %493 = vmatpush1.bf16.msra.mxu0 0
        %494 = vmatprep.subr.bf16.mxu0 0
        %495 = vmatpush1.bf16.msra.mxu0 0
        %496 = vmatprep.mubr.bf16.mxu0 0
        %497 = vmatmul.mubr.bf16.gmra.mrb[0].mxu0 %v302
        %v498 = vpop.f32.mrb[0].mxu0
        %v499 = vadd.f32 0.0, %v498
        %v500 = vpop.f32.mrb[0].mxu0
        %v501 = vadd.f32 0.0, %v500
        %v502 = vpop.f32.mrb[0].mxu0
        %v503 = vadd.f32 0.0, %v502
        %v504 = vpop.f32.mrb[0].mxu0
        %v505 = vadd.f32 0.0, %v504
        %506 = vdwg.mxu0
        %507 = vmatprep.subr.bf16.mxu0 %v403
        %508 = vmatpush1.bf16.msra.mxu0 %v402
        %509 = vmatprep.subr.bf16.mxu0 %v407
        %510 = vmatpush1.bf16.msra.mxu0 %v406
        %511 = vmatprep.subr.bf16.mxu0 %v411
        %512 = vmatpush1.bf16.msra.mxu0 %v410
        %513 = vmatprep.subr.bf16.mxu0 %v415
        %514 = vmatpush1.bf16.msra.mxu0 %v414
        %515 = vmatprep.subr.bf16.mxu0 %v419
        %516 = vmatpush1.bf16.msra.mxu0 %v418
        %517 = vmatprep.subr.bf16.mxu0 %v423
        %518 = vmatpush1.bf16.msra.mxu0 %v422
        %519 = vmatprep.subr.bf16.mxu0 %v427
        %520 = vmatpush1.bf16.msra.mxu0 %v426
        %521 = vmatprep.subr.bf16.mxu0 %v431
        %522 = vmatpush1.bf16.msra.mxu0 %v430
        %523 = vmatprep.subr.bf16.mxu0 0
        %524 = vmatpush1.bf16.msra.mxu0 0
        %525 = vmatprep.subr.bf16.mxu0 0
        %526 = vmatpush1.bf16.msra.mxu0 0
        %527 = vmatprep.subr.bf16.mxu0 0
        %528 = vmatpush1.bf16.msra.mxu0 0
        %529 = vmatprep.subr.bf16.mxu0 0
        %530 = vmatpush1.bf16.msra.mxu0 0
        %531 = vmatprep.subr.bf16.mxu0 0
        %532 = vmatpush1.bf16.msra.mxu0 0
        %533 = vmatprep.subr.bf16.mxu0 0
        %534 = vmatpush1.bf16.msra.mxu0 0
        %535 = vmatprep.subr.bf16.mxu0 0
        %536 = vmatpush1.bf16.msra.mxu0 0
        %537 = vmatprep.subr.bf16.mxu0 0
        %538 = vmatpush1.bf16.msra.mxu0 0
        %539 = vmatprep.mubr.bf16.mxu0 0
        %540 = vmatmul.mubr.bf16.gmra.mrb[0].mxu0 %v302
        %v541 = vpop.f32.mrb[0].mxu0
        %v542 = vadd.f32 0.0, %v541
        %v543 = vpop.f32.mrb[0].mxu0
        %v544 = vadd.f32 0.0, %v543
        %v545 = vpop.f32.mrb[0].mxu0
        %v546 = vadd.f32 0.0, %v545
        %v547 = vpop.f32.mrb[0].mxu0
        %v548 = vadd.f32 0.0, %v547
        %549 = vdwg.mxu0
        %v550 = vxor.u32 %v499, 2147483648
        %v551 = vxor.u32 %v501, 2147483648
        %v552 = vxor.u32 %v503, 2147483648
        %v553 = vxor.u32 %v505, 2147483648
        %v554 = vmul.f32 %v550, 1.442695
        %v555 = vpow.pop %v554
        %v556 = vmul.f32 %v551, 1.442695
        %v557 = vpow.pop %v556
        %v558 = vmul.f32 %v552, 1.442695
        %v559 = vpow.pop %v558
        %v560 = vmul.f32 %v553, 1.442695
        %v561 = vpow.pop %v560
        %v562 = vadd.f32 %v555, 1.0
        %v563 = vadd.f32 %v557, 1.0
        %v564 = vadd.f32 %v559, 1.0
        %v565 = vadd.f32 %v561, 1.0
        %v566 = vrcp.pop %v562
        %v567 = vmul.f32 1.0, %v566
        %v568 = vrcp.pop %v563
        %v569 = vmul.f32 1.0, %v568
        %v570 = vrcp.pop %v564
        %v571 = vmul.f32 1.0, %v570
        %v572 = vrcp.pop %v565
        %v573 = vmul.f32 1.0, %v572
        %v574 = vmul.f32 %v499, %v567
        %v575 = vmul.f32 %v501, %v569
        %v576 = vmul.f32 %v503, %v571
        %v577 = vmul.f32 %v505, %v573
        %v578 = vmul.f32 %v574, %v542
        %v579 = vmul.f32 %v575, %v544
        %v580 = vmul.f32 %v576, %v546
        %v581 = vmul.f32 %v577, %v548
        %v582 = vld [vmem:[#allocation2] sm:$0xff]
        %v583 = vld [vmem:[#allocation2 + $0x8] sm:$0xff]
        %v584 = vpack.c.bf16 %v580, %v578
        %v585 = vpack.c.bf16 %v581, %v579
        %v586 = vld [vmem:[%s231] sm:$0xf]
        %v587 = vld [vmem:[%s231 + $0x4] sm:$0xf]
        %v588 = vld [vmem:[%s231 + $0x8] sm:$0xf]
        %v589 = vld [vmem:[%s231 + $0xc] sm:$0xf]
        %v590 = vld [vmem:[%s231 + $0x10] sm:$0xf]
        %v591 = vld [vmem:[%s231 + $0x14] sm:$0xf]
        %v592 = vld [vmem:[%s231 + $0x18] sm:$0xf]
        %v593 = vld [vmem:[%s231 + $0x1c] sm:$0xf]
        %v594 = vld [vmem:[%s231 + $0x20] sm:$0xf]
        %v595 = vld [vmem:[%s231 + $0x24] sm:$0xf]
        %v596 = vld [vmem:[%s231 + $0x28] sm:$0xf]
        %v597 = vld [vmem:[%s231 + $0x2c] sm:$0xf]
        %v598 = vld [vmem:[%s231 + $0x30] sm:$0xf]
        %v599 = vld [vmem:[%s231 + $0x34] sm:$0xf]
        %v600 = vld [vmem:[%s231 + $0x38] sm:$0xf]
        %v601 = vld [vmem:[%s231 + $0x3c] sm:$0xf]
        %v602 = vld [vmem:[%s231 + $0x40] sm:$0xf]
        %v603 = vld [vmem:[%s231 + $0x44] sm:$0xf]
        %v604 = vld [vmem:[%s231 + $0x48] sm:$0xf]
        %v605 = vld [vmem:[%s231 + $0x4c] sm:$0xf]
        %v606 = vld [vmem:[%s231 + $0x50] sm:$0xf]
        %v607 = vld [vmem:[%s231 + $0x54] sm:$0xf]
        %v608 = vld [vmem:[%s231 + $0x58] sm:$0xf]
        %v609 = vld [vmem:[%s231 + $0x5c] sm:$0xf]
        %v610 = vld [vmem:[%s231 + $0x60] sm:$0xf]
        %v611 = vld [vmem:[%s231 + $0x64] sm:$0xf]
        %v612 = vld [vmem:[%s231 + $0x68] sm:$0xf]
        %v613 = vld [vmem:[%s231 + $0x6c] sm:$0xf]
        %v614 = vld [vmem:[%s231 + $0x70] sm:$0xf]
        %v615 = vld [vmem:[%s231 + $0x74] sm:$0xf]
        %v616 = vld [vmem:[%s231 + $0x78] sm:$0xf]
        %v617 = vld [vmem:[%s231 + $0x7c] sm:$0xf]
        %v650 = vunpack.c.l.b16 %v586
        %v651 = vunpack.c.l.b16 %v587
        %v652 = vunpack.c.l.b16 %v588
        %v653 = vunpack.c.l.b16 %v589
        %v654 = vunpack.c.l.b16 %v590
        %v655 = vunpack.c.l.b16 %v591
        %v656 = vunpack.c.l.b16 %v592
        %v657 = vunpack.c.l.b16 %v593
        %v658 = vunpack.c.l.b16 %v594
        %v659 = vunpack.c.l.b16 %v595
        %v660 = vunpack.c.l.b16 %v596
        %v661 = vunpack.c.l.b16 %v597
        %v662 = vunpack.c.l.b16 %v598
        %v663 = vunpack.c.l.b16 %v599
        %v664 = vunpack.c.l.b16 %v600
        %v665 = vunpack.c.l.b16 %v601
        %v666 = vunpack.c.l.b16 %v602
        %v667 = vunpack.c.l.b16 %v603
        %v668 = vunpack.c.l.b16 %v604
        %v669 = vunpack.c.l.b16 %v605
        %v670 = vunpack.c.l.b16 %v606
        %v671 = vunpack.c.l.b16 %v607
        %v672 = vunpack.c.l.b16 %v608
        %v673 = vunpack.c.l.b16 %v609
        %v674 = vunpack.c.l.b16 %v610
        %v675 = vunpack.c.l.b16 %v611
        %v676 = vunpack.c.l.b16 %v612
        %v677 = vunpack.c.l.b16 %v613
        %v678 = vunpack.c.l.b16 %v614
        %v679 = vunpack.c.l.b16 %v615
        %v680 = vunpack.c.l.b16 %v616
        %v681 = vunpack.c.l.b16 %v617
        %v682 = vpack.c.b16 %v651, %v650
        %v683 = vpack.c.b16 %v653, %v652
        %v684 = vpack.c.b16 %v655, %v654
        %v685 = vpack.c.b16 %v657, %v656
        %v686 = vpack.c.b16 %v659, %v658
        %v687 = vpack.c.b16 %v661, %v660
        %v688 = vpack.c.b16 %v663, %v662
        %v689 = vpack.c.b16 %v665, %v664
        %v690 = vpack.c.b16 %v667, %v666
        %v691 = vpack.c.b16 %v669, %v668
        %v692 = vpack.c.b16 %v671, %v670
        %v693 = vpack.c.b16 %v673, %v672
        %v694 = vpack.c.b16 %v675, %v674
        %v695 = vpack.c.b16 %v677, %v676
        %v696 = vpack.c.b16 %v679, %v678
        %v697 = vpack.c.b16 %v681, %v680
        %714 = vmatprep.subr.bf16.mxu0 0
        %715 = vmatpush1.bf16.msra.mxu0 %v682
        %716 = vmatprep.subr.bf16.mxu0 0
        %717 = vmatpush1.bf16.msra.mxu0 %v683
        %718 = vmatprep.subr.bf16.mxu0 0
        %719 = vmatpush1.bf16.msra.mxu0 %v684
        %720 = vmatprep.subr.bf16.mxu0 0
        %721 = vmatpush1.bf16.msra.mxu0 %v685
        %722 = vmatprep.subr.bf16.mxu0 0
        %723 = vmatpush1.bf16.msra.mxu0 %v686
        %724 = vmatprep.subr.bf16.mxu0 0
        %725 = vmatpush1.bf16.msra.mxu0 %v687
        %726 = vmatprep.subr.bf16.mxu0 0
        %727 = vmatpush1.bf16.msra.mxu0 %v688
        %728 = vmatprep.subr.bf16.mxu0 0
        %729 = vmatpush1.bf16.msra.mxu0 %v689
        %730 = vmatprep.subr.bf16.mxu0 0
        %731 = vmatpush1.bf16.msra.mxu0 %v690
        %732 = vmatprep.subr.bf16.mxu0 0
        %733 = vmatpush1.bf16.msra.mxu0 %v691
        %734 = vmatprep.subr.bf16.mxu0 0
        %735 = vmatpush1.bf16.msra.mxu0 %v692
        %736 = vmatprep.subr.bf16.mxu0 0
        %737 = vmatpush1.bf16.msra.mxu0 %v693
        %738 = vmatprep.subr.bf16.mxu0 0
        %739 = vmatpush1.bf16.msra.mxu0 %v694
        %740 = vmatprep.subr.bf16.mxu0 0
        %741 = vmatpush1.bf16.msra.mxu0 %v695
        %742 = vmatprep.subr.bf16.mxu0 0
        %743 = vmatpush1.bf16.msra.mxu0 %v696
        %744 = vmatprep.subr.bf16.mxu0 0
        %745 = vmatpush1.bf16.msra.mxu0 %v697
        %746 = vmatprep.mubr.bf16.mxu0 %v585
        %747 = vmatmul.mubr.bf16.gmra.mrb[0].mxu0 %v584
        %v748 = vpop.f32.mrb[0].mxu0
        %v749 = vadd.f32 0.0, %v748
        %v750 = vpop.f32.mrb[0].mxu0
        %v751 = vpop.f32.mrb[0].mxu0
        %v752 = vadd.f32 0.0, %v751
        %v753 = vpop.f32.mrb[0].mxu0
        %754 = vdwg.mxu0
        %v755 = vadd.f32 %v582, %v749
        %v756 = vadd.f32 %v583, %v752
        %757 = vst [vmem:[#allocation2] sm:$0xff] %v755
        %758 = vst [vmem:[#allocation2 + $0x8] sm:$0xff] %v756
        %p759 = scmp.eq.s32.totalorder %s24, 1
        // Predicated region
        $region49: #{tpu_custom_call.1} parent=31 // pred_check
          %p760 = pneg %p759
        $region50: #{tpu_custom_call.1} parent=31 // pred_check_branch
          %762 = sbr.rel (%p760) target = $region52
        $region51: #{tpu_custom_call.1} parent=31 // pred_region
          %v763 = vld [vmem:[#allocation2] sm:$0xff]
          %v764 = vld [vmem:[#allocation2 + $0x8] sm:$0xff]
          %v765 = vpack.c.bf16 %v764, %v763
          %v767 = vunpack.c.l.b16 %v765
          %v768 = vunpack.c.h.b16 %v765
          %v769 = vpack.c.b16 %v767, %v767
          %v770 = vpack.c.b16 %v768, %v768
          %773 = vst [vmem:[#allocation9] sm:$0xf] %v769
          %774 = vst [vmem:[#allocation9 + $0x4] sm:$0xf] %v770
        $region52: #{tpu_custom_call.1} parent=31 // pred_fallthru
          _
        // Predicated region
        $region53: #{tpu_custom_call.1} parent=31 // pred_check
          %p775 = pneg %p127
        $region54: #{tpu_custom_call.1} parent=31 // pred_check_branch
          %777 = sbr.rel (%p775) target = $region56
        $region55: #{tpu_custom_call.1} parent=31 // pred_region
          %s778 = smul.u32 2, %s23
          %s780 = ssub.s32 128, 128
          %781 = vsyncadd [#allocation5], %s780
          %s782 = smul.addr %s778, 64
          %s783 = scalar_lea.hbm %s3, %s782
          %s784 = sshll.u32 [#allocation9], 4
          %s785 = int_to_ptr.vmem [resolvable:$true] %s784
          %790 = dma.vmem_to_hbm [thread:$0]  %s785, 128, %s783, [#allocation5], 64, 64, 4
        $region56: #{tpu_custom_call.1} parent=31 // pred_fallthru
          _
        // Predicated region
        $region57: #{tpu_custom_call.1} parent=31 // pred_check
          %p791 = pneg %p127
        $region58: #{tpu_custom_call.1} parent=31 // pred_check_branch
          %793 = sbr.rel (%p791) target = $region60
        $region59: #{tpu_custom_call.1} parent=31 // pred_region
          %794 = dma.done [#allocation5], 128
        $region60: #{tpu_custom_call.1} parent=31 // pred_fallthru
          _
      $region32: #{tpu_custom_call.1} parent=5 // pred_fallthru
        _
      %p795 = scmp.le.s32.totalorder 2, %s14
      // Predicated region
      $region61: #{tpu_custom_call.1} parent=5 // pred_check
        %p796 = pneg %p795
      $region62: #{tpu_custom_call.1} parent=5 // pred_check_branch
        %798 = sbr.rel (%p796) target = $region64
      $region63: #{tpu_custom_call.1} parent=5 // pred_region
        %s799 = ssub.s32 %s14, 2
      $region64: #{tpu_custom_call.1} parent=5 // pred_fallthru
        _
    $region6: #{tpu_custom_call.1} parent=1 // loop_footer
      %s18 = sadd.s32 1, %s14
    $region7: #{tpu_custom_call.1} parent=1 // loop_footer_branch
      %13 = sbr.rel target = $region3
    $region8: #{tpu_custom_call.1} parent=1 // loop_exit
      _
    %800 = vsyncpa [#allocation4], 1
    %s801 = scalar_lea.sflag [#allocation4], 1
    %802 = vsyncpa %s801, 1
    %803 = vsyncpa [#allocation7], 1
    %s804 = scalar_lea.sflag [#allocation7], 1
    %805 = vsyncpa %s804, 1
    %806 = vsyncpa [#allocation5], 1
    %s807 = scalar_lea.sflag [#allocation5], 1
    %808 = vsyncpa %s807, 1

</llo_original>
